<compile_context>
chip_gen: v7x
topology: tpu7x:2x2x1
jax: 0.10.0
libtpu: 0.0.40
codegen_flags: <defaults>
</compile_context>

<pallas_src>
import functools

import jax
import jax.numpy as jnp
import numpy as np
from jax.experimental import pallas as pl
from jax.experimental.pallas import tpu as pltpu


def _round_up(x, m):
    return ((x + m - 1) // m) * m


# --------------------------------------------------------------------------
# Kernel: one (batch-tile, layer) grid step.
# --------------------------------------------------------------------------
def _decoder_kernel(x_ref, w_ref, b_ref, o_ref, h_ref, *, negative_slope):
    """x_ref: (TB, P) f32      input tile (consumed at layer 0 only)
       w_ref: (1, P, P) bf16   this layer's weight, [in, out] layout
       b_ref: (1, 1, P) bf16   this layer's bias
       o_ref: (TB, P) f32      output tile (written at last layer only)
       h_ref: (TB, P) f32      VMEM scratch carrying the running activation
    """
    layer = pl.program_id(1)

    @pl.when(layer == 0)
    def _():
        h_ref[...] = x_ref[...].astype(jnp.float32)

    # bf16 x bf16 operands -> f32 accumulation on the MXU.
    y = jnp.dot(h_ref[...].astype(jnp.bfloat16), w_ref[0],
                preferred_element_type=jnp.float32)
    y = y + b_ref[0].astype(jnp.float32)            # (TB,P) + (1,P) broadcast
    # LeakyReLU with slope in [0, 1): max(y, slope*y)  (mul + max, no select)
    y = jnp.maximum(y, negative_slope * y)
    h_ref[...] = y

    @pl.when(layer == pl.num_programs(1) - 1)
    def _():
        o_ref[...] = y.astype(o_ref.dtype)


def _fused_decoder(x_pad, w_stack, b_stack, negative_slope, tb):
    Bp, P = x_pad.shape
    L = w_stack.shape[0]
    kernel = functools.partial(_decoder_kernel, negative_slope=negative_slope)
    flops = 2 * Bp * P * P * L
    bytes_accessed = (x_pad.size * x_pad.dtype.itemsize
                      + w_stack.size * w_stack.dtype.itemsize
                      + b_stack.size * b_stack.dtype.itemsize
                      + Bp * P * 4)
    return pl.pallas_call(
        kernel,
        out_shape=jax.ShapeDtypeStruct((Bp, P), jnp.float32),
        grid_spec=pltpu.PrefetchScalarGridSpec(
            num_scalar_prefetch=0,
            grid=(Bp // tb, L),                      # layer axis innermost
            in_specs=[
                pl.BlockSpec((tb, P), lambda i, l: (i, 0)),      # activations
                pl.BlockSpec((1, P, P), lambda i, l: (l, 0, 0)),  # per-layer W
                pl.BlockSpec((1, 1, P), lambda i, l: (l, 0, 0)),  # per-layer b
            ],
            out_specs=pl.BlockSpec((tb, P), lambda i, l: (i, 0)),
            scratch_shapes=[pltpu.VMEM((tb, P), jnp.float32)],   # running act
        ),
        compiler_params=pltpu.CompilerParams(
            dimension_semantics=("parallel", "arbitrary")),      # v7x megacore
        cost_estimate=pl.CostEstimate(
            flops=flops, transcendentals=0, bytes_accessed=bytes_accessed),
    )(x_pad, w_stack, b_stack)


# --------------------------------------------------------------------------
# Parameter construction / one-time packing
# --------------------------------------------------------------------------
def make_decoder_params(key, input_size, output_size, n_hidden_layers):
    """Deterministic init matching the PyTorch layer-size schedule."""
    indices = np.arange(2 + n_hidden_layers)
    data_indices = np.array([indices[0], indices[-1]])
    data = np.array([input_size, output_size])
    layer_sizes = np.interp(indices, data_indices, data).astype(int)

    params = []
    for i in range(1, len(layer_sizes)):
        fan_in = int(layer_sizes[i - 1])
        fan_out = int(layer_sizes[i])
        key, wk, bk = jax.random.split(key, 3)
        bound = 1.0 / np.sqrt(fan_in)           # torch.nn.Linear default range
        w = jax.random.uniform(wk, (fan_out, fan_in), jnp.float32,
                               minval=-bound, maxval=bound)
        b = jax.random.uniform(bk, (fan_out,), jnp.float32,
                               minval=-bound, maxval=bound)
        params.append((w, b))
    return params


def pack_decoder_params(params, param_dtype=jnp.bfloat16):
    """One-time: transpose to [in,out], zero-pad to lane-dense (P,P) tiles,
    cast to bf16 and stack into (L,P,P) weights / (L,1,P) biases."""
    widths = [params[0][0].shape[1]] + [w.shape[0] for w, _ in params]
    P = _round_up(max(widths), 128)
    L = len(params)
    # TODO(synk): for large non-uniform decoders pad per layer (8/128) instead
    # of to the global max width to cut redundant weight DMA further.
    w_stack = jnp.zeros((L, P, P), param_dtype)
    b_stack = jnp.zeros((L, 1, P), param_dtype)
    for l, (w, b) in enumerate(params):
        out_d, in_d = w.shape
        w_stack = w_stack.at[l, :in_d, :out_d].set(
            jnp.transpose(w).astype(param_dtype))
        b_stack = b_stack.at[l, 0, :out_d].set(b.astype(param_dtype))
    return w_stack, b_stack


# --------------------------------------------------------------------------
# Jitted forward
# --------------------------------------------------------------------------
@functools.partial(jax.jit,
                   static_argnames=("output_size", "negative_slope",
                                    "block_batch"))
def decoder_forward(x, w_stack, b_stack, *, output_size, negative_slope=0.2,
                    block_batch=256):
    B, in_dim = x.shape
    P = w_stack.shape[-1]
    tb = min(block_batch, _round_up(B, 8))    # 256-row MXU tiles when B allows
    Bp = _round_up(B, tb)
    # Cheap feature-dim (plus <=tb-1 batch rows) zero-pad; exact because padded
    # weight rows/cols and biases are 0 and LeakyReLU(0)=0.
    x_pad = jnp.zeros((Bp, P), jnp.float32).at[:B, :in_dim].set(
        x.astype(jnp.float32))
    y_pad = _fused_decoder(x_pad, w_stack, b_stack, negative_slope, tb)
    return y_pad[:B, :output_size]


def decoder_reference(x, params, negative_slope=0.2):
    """Pure-JAX f32 reference matching the PyTorch module (LeakyReLU after
    every Linear, including the last — that is what nn.Sequential builds)."""
    h = x
    for w, b in params:
        h = h @ w.T + b
        h = jnp.where(h >= 0.0, h, negative_slope * h)
    return h


if __name__ == "__main__":
    batch = 2
    input_size = 8      # decoder latent size
    output_size = 32    # reconstructed feature size
    n_hidden_layers = 2
    negative_slope = 0.2

    key = jax.random.PRNGKey(0)
    key, xk = jax.random.split(key)
    x = jax.random.normal(xk, (batch, input_size), jnp.float32)

    params = make_decoder_params(key, input_size, output_size, n_hidden_layers)
    w_stack, b_stack = pack_decoder_params(params)     # packed once, reused

    out = decoder_forward(x, w_stack, b_stack,
                          output_size=output_size,
                          negative_slope=negative_slope)
    out = jax.block_until_ready(out)

    ref = decoder_reference(x, params, negative_slope)
    assert out.shape == (batch, output_size), out.shape
    # bf16 weights/activations on the MXU -> loosened tolerance vs f32 ref.
    np.testing.assert_allclose(np.asarray(out), np.asarray(ref),
                               rtol=5e-2, atol=5e-2)

    # Secondary check: multi-tile batch grid (exercises the "parallel" axis,
    # batch-tile revisits of the weight blocks and scratch re-init per tile).
    key, xk2 = jax.random.split(key)
    x_big = jax.random.normal(xk2, (300, input_size), jnp.float32)
    out_big = jax.block_until_ready(
        decoder_forward(x_big, w_stack, b_stack,
                        output_size=output_size,
                        negative_slope=negative_slope))
    ref_big = decoder_reference(x_big, params, negative_slope)
    np.testing.assert_allclose(np.asarray(out_big), np.asarray(ref_big),
                               rtol=5e-2, atol=5e-2)

    print("KERNEL_OK")
</pallas_src>

<mosaic_0001>
module attributes {stable_mosaic.version = 11 : i64} {
  func.func @_decoder_kernel(%arg0: i32, %arg1: i32, %arg2: memref<8x128xf32, #tpu.memory_space<vmem>>, %arg3: memref<1x128x128xbf16, #tpu.memory_space<vmem>>, %arg4: memref<1x1x128xbf16, #tpu.memory_space<vmem>>, %arg5: memref<8x128xf32, #tpu.memory_space<vmem>>, %arg6: memref<8x128xf32, #tpu.memory_space<vmem>>) attributes {dimension_semantics = [#tpu.dimension_semantics<parallel>, #tpu.dimension_semantics<arbitrary>], iteration_bounds = array<i64: 1, 3>, scalar_prefetch = 0 : i64, scratch_operands = 1 : i64, tpu.core_type = #tpu.core_type<tc>, window_params = [{transform_indices = @transform_0, window_bounds = array<i64: 8, 128>}, {transform_indices = @transform_1, window_bounds = array<i64: 1, 128, 128>}, {transform_indices = @transform_2, window_bounds = array<i64: 1, 1, 128>}, {transform_indices = @transform_3, window_bounds = array<i64: 8, 128>}]} {
    %c0_i32 = arith.constant 0 : i32
    %0 = arith.cmpi eq, %arg1, %c0_i32 : i32
    %1 = arith.extui %0 : i1 to i32
    %c0_i32_0 = arith.constant 0 : i32
    %2 = arith.cmpi ne, %1, %c0_i32_0 : i32
    scf.if %2 {
      %c0_12 = arith.constant 0 : index
      %c0_13 = arith.constant 0 : index
      %20 = vector.load %arg2[%c0_12, %c0_13] : memref<8x128xf32, #tpu.memory_space<vmem>>, vector<8x128xf32>
      %c0_14 = arith.constant 0 : index
      %c0_15 = arith.constant 0 : index
      %21 = vector.load %arg6[%c0_14, %c0_15] : memref<8x128xf32, #tpu.memory_space<vmem>>, vector<8x128xf32>
      tpu.vector_store %arg6[%c0_14, %c0_15], %20 {strides = array<i32>} : memref<8x128xf32, #tpu.memory_space<vmem>>, vector<8x128xf32>,
    } else {
    }
    %c0 = arith.constant 0 : index
    %c0_1 = arith.constant 0 : index
    %3 = vector.load %arg6[%c0, %c0_1] : memref<8x128xf32, #tpu.memory_space<vmem>>, vector<8x128xf32>
    %4 = arith.truncf %3 : vector<8x128xf32> to vector<8x128xbf16>
    %c0_2 = arith.constant 0 : index
    %c0_3 = arith.constant 0 : index
    %c0_4 = arith.constant 0 : index
    %5 = vector.load %arg3[%c0_2, %c0_3, %c0_4] : memref<1x128x128xbf16, #tpu.memory_space<vmem>>, vector<1x128x128xbf16>
    %6 = vector.shape_cast %5 : vector<1x128x128xbf16> to vector<128x128xbf16>
    %cst = arith.constant dense<0.000000e+00> : vector<8x128xf32>
    %7 = tpu.matmul %4, %6, %cst {dimension_numbers = #tpu.dot_dimension_numbers<[1], [0], [0], [1], [0, 0, 1, 1], [], []>} : vector<8x128xbf16>, vector<128x128xbf16>, vector<8x128xf32> -> vector<8x128xf32>
    %c0_5 = arith.constant 0 : index
    %c0_6 = arith.constant 0 : index
    %c0_7 = arith.constant 0 : index
    %8 = vector.load %arg4[%c0_5, %c0_6, %c0_7] : memref<1x1x128xbf16, #tpu.memory_space<vmem>>, vector<1x1x128xbf16>
    %9 = vector.shape_cast %8 : vector<1x1x128xbf16> to vector<1x128xbf16>
    %10 = arith.extf %9 : vector<1x128xbf16> to vector<1x128xf32>
    %11 = vector.broadcast %10 : vector<1x128xf32> to vector<8x128xf32>
    %12 = arith.addf %7, %11 : vector<8x128xf32>
    %cst_8 = arith.constant 2.000000e-01 : f32
    %13 = vector.broadcast %cst_8 : f32 to vector<8x128xf32>
    %14 = arith.mulf %13, %12 : vector<8x128xf32>
    %15 = arith.maximumf %12, %14 : vector<8x128xf32>
    %c0_9 = arith.constant 0 : index
    %c0_10 = arith.constant 0 : index
    %16 = vector.load %arg6[%c0_9, %c0_10] : memref<8x128xf32, #tpu.memory_space<vmem>>, vector<8x128xf32>
    tpu.vector_store %arg6[%c0_9, %c0_10], %15 {strides = array<i32>} : memref<8x128xf32, #tpu.memory_space<vmem>>, vector<8x128xf32>,
    %c2_i32 = arith.constant 2 : i32
    %17 = arith.cmpi eq, %arg1, %c2_i32 : i32
    %18 = arith.extui %17 : i1 to i32
    %c0_i32_11 = arith.constant 0 : i32
    %19 = arith.cmpi ne, %18, %c0_i32_11 : i32
    scf.if %19 {
      %c0_12 = arith.constant 0 : index
      %c0_13 = arith.constant 0 : index
      %20 = vector.load %arg5[%c0_12, %c0_13] : memref<8x128xf32, #tpu.memory_space<vmem>>, vector<8x128xf32>
      tpu.vector_store %arg5[%c0_12, %c0_13], %15 {strides = array<i32>} : memref<8x128xf32, #tpu.memory_space<vmem>>, vector<8x128xf32>,
    } else {
    }
    return
  }
  func.func @transform_0(%arg0: i32, %arg1: i32) -> (i32, i32) {
    %c0_i32 = arith.constant 0 : i32
    %c0_i32_0 = arith.constant 0 : i32
    return %arg0, %c0_i32 : i32, i32
  }
  func.func @transform_1(%arg0: i32, %arg1: i32) -> (i32, i32, i32) {
    %c0_i32 = arith.constant 0 : i32
    %c0_i32_0 = arith.constant 0 : i32
    %c0_i32_1 = arith.constant 0 : i32
    return %arg1, %c0_i32, %c0_i32_0 : i32, i32, i32
  }
  func.func @transform_2(%arg0: i32, %arg1: i32) -> (i32, i32, i32) {
    %c0_i32 = arith.constant 0 : i32
    %c0_i32_0 = arith.constant 0 : i32
    %c0_i32_1 = arith.constant 0 : i32
    return %arg1, %c0_i32, %c0_i32_0 : i32, i32, i32
  }
  func.func @transform_3(%arg0: i32, %arg1: i32) -> (i32, i32) {
    %c0_i32 = arith.constant 0 : i32
    %c0_i32_0 = arith.constant 0 : i32
    return %arg0, %c0_i32 : i32, i32
  }
}

</mosaic_0001>

<llo_original>
// kernel: decoder_forward.1
$region0: #{decoder_forward.1}
  #allocation0 [shape = 'u32[]', space=smem, size = 0x4, offset = 0x4, fixed_abs, tag = 'smem constant byte address 0x4 - core index']
  #allocation1 [shape = 'u32[144,128]{1,0:T(1,128)}', space=vmem, size = 0x12000, scoped, tag = 'internal scratch']
  #allocation2 [shape = 'f32[8,128]{1,0:T(8,128)}', space=vmem, size = 0x1000, scoped, tag = 'scratch operand']
  %s0 = inlined_call_operand.vmem [shape: f32[8,128], index: 0, kind: input, shape index: {}]
  %s1 = inlined_call_operand.hbm [shape: bf16[3,128,128], index: 1, kind: input, shape index: {}]
  %s2 = inlined_call_operand.vmem [shape: bf16[3,1,128], index: 2, kind: input, shape index: {}]
  %s3 = inlined_call_operand.vmem [shape: f32[8,128], index: 3, kind: output, shape index: {}]
  %s4 = sld [smem:[#allocation0]]
  $region57: #{decoder_forward.1} parent=0
    _
  %s6 = ssub.s32 1, %s4
  %s7 = scalar_select 0, %s6, %s4
  $region1: #{decoder_forward.1} parent=0
    #allocation3 [shape = 'u8[65536]{0}', space=vmem, size = 0x10000, scoped, tag = 'input window, operand 1']
    #allocation4 [shape = 's32[2]{0}', space=sflag, size = 0x8, scoped, tag = 'scoped memory for decoder_forward.1']
    %8 = vsyncpa [#allocation4], 0
    %s9 = scalar_lea.sflag [#allocation4], 1
    %10 = vsyncpa %s9, 0
    loop: start=0, step=1, limit=5
    $region2: #{decoder_forward.1} parent=1 // loop_pre_header
      _
    $region3: #{decoder_forward.1} parent=1 // loop_header
      %s12 = sphi 0, %s16
      %p13 = scmp.ge.s32.totalorder %s12, 5
      %s19 = sphi 0, %s31
      %s20 = sphi 0, %s27
      %s21 = sphi 0, %s19
      %s22 = sphi 0, %s20
      %s23 = sphi 0, %s21
      %s24 = sphi 0, %s22
      %s34 = sphi 0, %s36
      %s37 = sphi 0, %s34
      %s38 = sphi 0, %s37
      %s54 = sphi 0, %s38
      %s60 = sphi 0, %s62
      %s63 = sphi 0, %s60
      %s64 = sphi 0, %s63
      %s80 = sphi 0, %s64
      %s86 = sphi 0, %s88
      %s89 = sphi 0, %s86
      %s90 = sphi 0, %s89
      %s106 = sphi 0, %s90
      %s112 = sphi 0, %s114
      %s115 = sphi 0, %s112
      %s116 = sphi 0, %s115
      %s132 = sphi 0, %s116
    $region4: #{decoder_forward.1} parent=1 // loop_header_branch
      %15 = sbr.rel (%p13) target = $region8
    $region5: #{decoder_forward.1} parent=1 // loop_body
      %s17 = ssub.s32 %s12, 1
      %s18 = ssub.s32 %s12, 2
      %s25 = sadd.s32 1, %s20
      %p26 = scmp.ge.s32.totalorder %s25, 3
      %s27 = scalar_select %p26, 0, %s25
      %s28 = sadd.s32 1, %s19
      %s29 = scalar_select %p26, %s28, %s19
      %p30 = scmp.ge.s32.totalorder %s29, 1
      %s31 = scalar_select %p30, 0, %s29
      %s32 = ssub.s32 %s19, %s31
      %p33 = scmp.eq.s32.totalorder %s32, 0
      %s35 = sadd.s32 %s34, 1
      %s36 = scalar_select %p33, %s34, %s35
      %p39 = pneg %p33
      %p40 = scmp.eq.s32.totalorder %s12, 2
      %p41 = por %p39, %p40
      %p42 = scmp.ne.s32.totalorder %s34, %s37
      %p43 = scmp.eq.s32.totalorder %s12, 0
      %p44 = por %p42, %p43
      %p45 = scmp.ne.s32.totalorder %s34, %s37
      %p46 = scmp.eq.s32.totalorder %s17, 2
      %p47 = por %p45, %p46
      %p48 = scmp.ne.s32.totalorder %s37, %s38
      %p49 = scmp.eq.s32.totalorder %s17, 0
      %p50 = por %p48, %p49
      %p51 = scmp.ne.s32.totalorder %s37, %s38
      %p52 = scmp.eq.s32.totalorder %s18, 2
      %p53 = por %p51, %p52
      %p55 = scmp.ne.s32.totalorder %s38, %s54
      %p56 = scmp.eq.s32.totalorder %s18, 0
      %p57 = por %p55, %p56
      %s58 = ssub.s32 %s20, %s27
      %p59 = scmp.eq.s32.totalorder %s58, 0
      %s61 = sadd.s32 %s60, 1
      %s62 = scalar_select %p59, %s60, %s61
      %p65 = pneg %p59
      %p66 = scmp.eq.s32.totalorder %s12, 2
      %p67 = por %p65, %p66
      %p68 = scmp.ne.s32.totalorder %s60, %s63
      %p69 = scmp.eq.s32.totalorder %s12, 0
      %p70 = por %p68, %p69
      %p71 = scmp.ne.s32.totalorder %s60, %s63
      %p72 = scmp.eq.s32.totalorder %s17, 2
      %p73 = por %p71, %p72
      %p74 = scmp.ne.s32.totalorder %s63, %s64
      %p75 = scmp.eq.s32.totalorder %s17, 0
      %p76 = por %p74, %p75
      %p77 = scmp.ne.s32.totalorder %s63, %s64
      %p78 = scmp.eq.s32.totalorder %s18, 2
      %p79 = por %p77, %p78
      %p81 = scmp.ne.s32.totalorder %s64, %s80
      %p82 = scmp.eq.s32.totalorder %s18, 0
      %p83 = por %p81, %p82
      %s84 = ssub.s32 %s20, %s27
      %p85 = scmp.eq.s32.totalorder %s84, 0
      %s87 = sadd.s32 %s86, 1
      %s88 = scalar_select %p85, %s86, %s87
      %p91 = pneg %p85
      %p92 = scmp.eq.s32.totalorder %s12, 2
      %p93 = por %p91, %p92
      %p94 = scmp.ne.s32.totalorder %s86, %s89
      %p95 = scmp.eq.s32.totalorder %s12, 0
      %p96 = por %p94, %p95
      %p97 = scmp.ne.s32.totalorder %s86, %s89
      %p98 = scmp.eq.s32.totalorder %s17, 2
      %p99 = por %p97, %p98
      %p100 = scmp.ne.s32.totalorder %s89, %s90
      %p101 = scmp.eq.s32.totalorder %s17, 0
      %p102 = por %p100, %p101
      %p103 = scmp.ne.s32.totalorder %s89, %s90
      %p104 = scmp.eq.s32.totalorder %s18, 2
      %p105 = por %p103, %p104
      %p107 = scmp.ne.s32.totalorder %s90, %s106
      %p108 = scmp.eq.s32.totalorder %s18, 0
      %p109 = por %p107, %p108
      %s110 = ssub.s32 %s19, %s31
      %p111 = scmp.eq.s32.totalorder %s110, 0
      %s113 = sadd.s32 %s112, 1
      %s114 = scalar_select %p111, %s112, %s113
      %p117 = pneg %p111
      %p118 = scmp.eq.s32.totalorder %s12, 2
      %p119 = por %p117, %p118
      %p120 = scmp.ne.s32.totalorder %s112, %s115
      %p121 = scmp.eq.s32.totalorder %s12, 0
      %p122 = por %p120, %p121
      %p123 = scmp.ne.s32.totalorder %s112, %s115
      %p124 = scmp.eq.s32.totalorder %s17, 2
      %p125 = por %p123, %p124
      %p126 = scmp.ne.s32.totalorder %s115, %s116
      %p127 = scmp.eq.s32.totalorder %s17, 0
      %p128 = por %p126, %p127
      %p129 = scmp.ne.s32.totalorder %s115, %s116
      %p130 = scmp.eq.s32.totalorder %s18, 2
      %p131 = por %p129, %p130
      %p133 = scmp.ne.s32.totalorder %s116, %s132
      %p134 = scmp.eq.s32.totalorder %s18, 0
      %p135 = por %p133, %p134
      %p136 = scmp.le.s32.totalorder 1, %s12
      %p137 = scmp.lt.s32.totalorder %s12, 4
      %p138 = pnand %p136, %p137
      %p139 = pneg %p138
      // Predicated region
      $region9: #{decoder_forward.1} parent=5 // pred_check
        _
      $region10: #{decoder_forward.1} parent=5 // pred_check_branch
        %141 = sbr.rel (%p138) target = $region12
      $region11: #{decoder_forward.1} parent=5 // pred_region
        %s142 = ssub.s32 %s12, 1
        // Predicated region
        $region13: #{decoder_forward.1} parent=11 // pred_check
          %p143 = pneg %p50
        $region14: #{decoder_forward.1} parent=11 // pred_check_branch
          %145 = sbr.rel (%p143) target = $region16
        $region15: #{decoder_forward.1} parent=11 // pred_region
          %p146 = scmp.lt.s32.totalorder %s21, 0
          %s147 = scalar_select %p146, %s21, 0
          %s148 = smul.addr %s147, 8
          %s149 = scalar_lea.vmem %s0, %s148
        $region16: #{decoder_forward.1} parent=11 // pred_fallthru
          _
      $region12: #{decoder_forward.1} parent=5 // pred_fallthru
        _
      %p150 = scmp.lt.s32.totalorder %s12, 3
      // Predicated region
      $region17: #{decoder_forward.1} parent=5 // pred_check
        %p151 = pneg %p150
      $region18: #{decoder_forward.1} parent=5 // pred_check_branch
        %153 = sbr.rel (%p151) target = $region20
      $region19: #{decoder_forward.1} parent=5 // pred_region
        // Predicated region
        $region21: #{decoder_forward.1} parent=19 // pred_check
          %p154 = pneg %p70
        $region22: #{decoder_forward.1} parent=19 // pred_check_branch
          %156 = sbr.rel (%p154) target = $region24
        $region23: #{decoder_forward.1} parent=19 // pred_region
          %s157 = sand.u32 %s60, 1
          %s158 = scalar_lea.sflag [#allocation4], %s157
          %s159 = sand.u32 %s60, 1
          %s160 = smul.addr %s159, 64
          %s161 = scalar_lea.vmem [#allocation3], %s160
          %s163 = ssub.s32 1024, 1024
          %164 = vsyncadd %s158, %s163
          %s165 = smul.addr %s20, 16
          %s166 = smul.addr %s165, 64
          %s167 = scalar_lea.hbm %s1, %s166
          %s168 = sshll.u32 %s161, 4
          %s169 = int_to_ptr.vmem [resolvable:$true] %s168
          %174 = dma.hbm_to_vmem [thread:$0]  %s167, 1024, %s169, %s158, 64, 64, 4
        $region24: #{decoder_forward.1} parent=19 // pred_fallthru
          _
        // Predicated region
        $region25: #{decoder_forward.1} parent=19 // pred_check
          %p175 = pneg %p96
        $region26: #{decoder_forward.1} parent=19 // pred_check_branch
          %177 = sbr.rel (%p175) target = $region28
        $region27: #{decoder_forward.1} parent=19 // pred_region
          %p178 = scmp.lt.s32.totalorder %s20, 2
          %s179 = scalar_select %p178, %s20, 2
          %s180 = scalar_lea.vmem %s2, %s179
        $region28: #{decoder_forward.1} parent=19 // pred_fallthru
          _
      $region20: #{decoder_forward.1} parent=5 // pred_fallthru
        _
      %p181 = scmp.le.s32.totalorder 1, %s12
      %p182 = scmp.lt.s32.totalorder %s12, 4
      %p183 = pnand %p181, %p182
      %p184 = pneg %p183
      // Predicated region
      $region29: #{decoder_forward.1} parent=5 // pred_check
        _
      $region30: #{decoder_forward.1} parent=5 // pred_check_branch
        %186 = sbr.rel (%p183) target = $region32
      $region31: #{decoder_forward.1} parent=5 // pred_region
        %s187 = ssub.s32 %s12, 1
        %s188 = sand.u32 %s63, 1
        %s189 = scalar_lea.sflag [#allocation4], %s188
        %s190 = sand.u32 %s63, 1
        %s191 = smul.addr %s190, 64
        %s192 = scalar_lea.vmem [#allocation3], %s191
        // Predicated region
        $region33: #{decoder_forward.1} parent=31 // pred_check
          %p193 = pneg %p76
        $region34: #{decoder_forward.1} parent=31 // pred_check_branch
          %195 = sbr.rel (%p193) target = $region36
        $region35: #{decoder_forward.1} parent=31 // pred_region
          %196 = dma.done %s189, 1024
        $region36: #{decoder_forward.1} parent=31 // pred_fallthru
          _
        %p197 = scmp.lt.s32.totalorder %s21, 0
        %s198 = scalar_select %p197, %s21, 0
        %s199 = smul.addr %s198, 8
        %s200 = scalar_lea.vmem %s0, %s199
        %p201 = pneg %p50
        %p202 = pneg %p47
        %s203 = sand.u32 %s63, 1
        %s204 = scalar_lea.sflag [#allocation4], %s203
        %s205 = sand.u32 %s63, 1
        %s206 = smul.addr %s205, 64
        %s207 = scalar_lea.vmem [#allocation3], %s206
        %p208 = pneg %p76
        %p209 = pneg %p73
        %p210 = scmp.lt.s32.totalorder %s22, 2
        %s211 = scalar_select %p210, %s22, 2
        %s212 = scalar_lea.vmem %s2, %s211
        %p213 = pneg %p102
        %p214 = pneg %p99
        %p215 = pneg %p128
        %p216 = pneg %p125
        %p217 = scmp.lt.s32.totalorder %s21, 0
        %s218 = scalar_select %p217, %s21, 0
        %s219 = smul.addr %s218, 8
        %s220 = scalar_lea.vmem %s3, %s219
        %p221 = scmp.lt.s32.totalorder %s21, 0
        %s222 = scalar_select %p221, %s21, 0
        %s223 = smul.addr %s222, 8
        %s224 = scalar_lea.vmem %s0, %s223
        %p225 = scmp.lt.s32.totalorder %s22, 2
        %s226 = scalar_select %p225, %s22, 2
        %s227 = scalar_lea.vmem %s2, %s226
        %p228 = scmp.lt.s32.totalorder %s21, 0
        %s229 = scalar_select %p228, %s21, 0
        %s230 = smul.addr %s229, 8
        %s231 = scalar_lea.vmem %s3, %s230
        %p233 = scmp.eq.s32.totalorder %s22, 0
        // Predicated region
        $region37: #{decoder_forward.1} parent=31 // pred_check
          %p234 = pneg %p233
        $region38: #{decoder_forward.1} parent=31 // pred_check_branch
          %236 = sbr.rel (%p234) target = $region40
        $region39: #{decoder_forward.1} parent=31 // pred_region
          %v237 = vld [vmem:[%s224] sm:$0xff]
          %238 = vst [vmem:[#allocation2] sm:$0xff] %v237
        $region40: #{decoder_forward.1} parent=31 // pred_fallthru
          _
        %v239 = vld [vmem:[#allocation2] sm:$0xff]
        %v240 = vpack.c.bf16 %v239, %v239
        %v241 = vld [vmem:[%s192] sm:$0xf]
        %v242 = vld [vmem:[%s192 + $0x4] sm:$0xf]
        %v243 = vld [vmem:[%s192 + $0x8] sm:$0xf]
        %v244 = vld [vmem:[%s192 + $0xc] sm:$0xf]
        %v245 = vld [vmem:[%s192 + $0x10] sm:$0xf]
        %v246 = vld [vmem:[%s192 + $0x14] sm:$0xf]
        %v247 = vld [vmem:[%s192 + $0x18] sm:$0xf]
        %v248 = vld [vmem:[%s192 + $0x1c] sm:$0xf]
        %v249 = vld [vmem:[%s192 + $0x20] sm:$0xf]
        %v250 = vld [vmem:[%s192 + $0x24] sm:$0xf]
        %v251 = vld [vmem:[%s192 + $0x28] sm:$0xf]
        %v252 = vld [vmem:[%s192 + $0x2c] sm:$0xf]
        %v253 = vld [vmem:[%s192 + $0x30] sm:$0xf]
        %v254 = vld [vmem:[%s192 + $0x34] sm:$0xf]
        %v255 = vld [vmem:[%s192 + $0x38] sm:$0xf]
        %v256 = vld [vmem:[%s192 + $0x3c] sm:$0xf]
        %v257 = vld [vmem:[%s227] sm:$0x1]
        %v258 = vunpack.c.l.bf16 %v257
        %v259 = vlaneseq
        %v260 = vshrl.u32 %v259, 7
        %v261 = vsub.s32 0, %v260
        %v262 = vrot.slane %v258, %v261
        %v279 = vunpack.c.l.b16 %v241
        %v280 = vunpack.c.l.b16 %v242
        %v281 = vunpack.c.l.b16 %v243
        %v282 = vunpack.c.l.b16 %v244
        %v283 = vunpack.c.l.b16 %v245
        %v284 = vunpack.c.l.b16 %v246
        %v285 = vunpack.c.l.b16 %v247
        %v286 = vunpack.c.l.b16 %v248
        %v287 = vunpack.c.l.b16 %v249
        %v288 = vunpack.c.l.b16 %v250
        %v289 = vunpack.c.l.b16 %v251
        %v290 = vunpack.c.l.b16 %v252
        %v291 = vunpack.c.l.b16 %v253
        %v292 = vunpack.c.l.b16 %v254
        %v293 = vunpack.c.l.b16 %v255
        %v294 = vunpack.c.l.b16 %v256
        %v295 = vpack.c.b16 %v280, %v279
        %v296 = vpack.c.b16 %v282, %v281
        %v297 = vpack.c.b16 %v284, %v283
        %v298 = vpack.c.b16 %v286, %v285
        %v299 = vpack.c.b16 %v288, %v287
        %v300 = vpack.c.b16 %v290, %v289
        %v301 = vpack.c.b16 %v292, %v291
        %v302 = vpack.c.b16 %v294, %v293
        %311 = vmatprep.subr.bf16.mxu0 0
        %312 = vmatpush1.bf16.msra.mxu0 %v295
        %313 = vmatprep.subr.bf16.mxu0 0
        %314 = vmatpush1.bf16.msra.mxu0 %v296
        %315 = vmatprep.subr.bf16.mxu0 0
        %316 = vmatpush1.bf16.msra.mxu0 %v297
        %317 = vmatprep.subr.bf16.mxu0 0
        %318 = vmatpush1.bf16.msra.mxu0 %v298
        %319 = vmatprep.subr.bf16.mxu0 0
        %320 = vmatpush1.bf16.msra.mxu0 %v299
        %321 = vmatprep.subr.bf16.mxu0 0
        %322 = vmatpush1.bf16.msra.mxu0 %v300
        %323 = vmatprep.subr.bf16.mxu0 0
        %324 = vmatpush1.bf16.msra.mxu0 %v301
        %325 = vmatprep.subr.bf16.mxu0 0
        %326 = vmatpush1.bf16.msra.mxu0 %v302
        %327 = vmatprep.subr.bf16.mxu0 0
        %328 = vmatpush1.bf16.msra.mxu0 0
        %329 = vmatprep.subr.bf16.mxu0 0
        %330 = vmatpush1.bf16.msra.mxu0 0
        %331 = vmatprep.subr.bf16.mxu0 0
        %332 = vmatpush1.bf16.msra.mxu0 0
        %333 = vmatprep.subr.bf16.mxu0 0
        %334 = vmatpush1.bf16.msra.mxu0 0
        %335 = vmatprep.subr.bf16.mxu0 0
        %336 = vmatpush1.bf16.msra.mxu0 0
        %337 = vmatprep.subr.bf16.mxu0 0
        %338 = vmatpush1.bf16.msra.mxu0 0
        %339 = vmatprep.subr.bf16.mxu0 0
        %340 = vmatpush1.bf16.msra.mxu0 0
        %341 = vmatprep.subr.bf16.mxu0 0
        %342 = vmatpush1.bf16.msra.mxu0 0
        %343 = vmatprep.mubr.bf16.mxu0 0
        %344 = vmatmul.mubr.bf16.gmra.mrb[0].mxu0 %v240
        %v345 = vpop.f32.mrb[0].mxu0
        %v346 = vadd.f32 %v262, %v345
        %v347 = vpop.f32.mrb[0].mxu0
        %v348 = vpop.f32.mrb[0].mxu0
        %v349 = vpop.f32.mrb[0].mxu0
        %350 = vdwg.mxu0
        %v351 = vmul.f32 %v346, 0.2
        %v352 = vmax.f32 %v346, %v351
        %353 = vst [vmem:[#allocation2] sm:$0xff] %v352
        %p354 = scmp.eq.s32.totalorder %s22, 2
        // Predicated region
        $region41: #{decoder_forward.1} parent=31 // pred_check
          %p355 = pneg %p354
        $region42: #{decoder_forward.1} parent=31 // pred_check_branch
          %357 = sbr.rel (%p355) target = $region44
        $region43: #{decoder_forward.1} parent=31 // pred_region
          %358 = vst [vmem:[%s231] sm:$0xff] %v352
        $region44: #{decoder_forward.1} parent=31 // pred_fallthru
          _
        %p359 = scmp.lt.s32.totalorder %s21, 0
        %s360 = scalar_select %p359, %s21, 0
        %s361 = smul.addr %s360, 8
        %s362 = scalar_lea.vmem %s3, %s361
        // Predicated region
        $region45: #{decoder_forward.1} parent=31 // pred_check
          %p363 = pneg %p125
        $region46: #{decoder_forward.1} parent=31 // pred_check_branch
          %365 = sbr.rel (%p363) target = $region48
        $region47: #{decoder_forward.1} parent=31 // pred_region
          _
        $region48: #{decoder_forward.1} parent=31 // pred_fallthru
          _
        // Predicated region
        $region49: #{decoder_forward.1} parent=31 // pred_check
          %p366 = pneg %p125
        $region50: #{decoder_forward.1} parent=31 // pred_check_branch
          %368 = sbr.rel (%p366) target = $region52
        $region51: #{decoder_forward.1} parent=31 // pred_region
          %p369 = scmp.lt.s32.totalorder %s21, 0
          %s370 = scalar_select %p369, %s21, 0
          %s371 = smul.addr %s370, 8
          %s372 = scalar_lea.vmem %s3, %s371
        $region52: #{decoder_forward.1} parent=31 // pred_fallthru
          _
      $region32: #{decoder_forward.1} parent=5 // pred_fallthru
        _
      %p373 = scmp.le.s32.totalorder 2, %s12
      // Predicated region
      $region53: #{decoder_forward.1} parent=5 // pred_check
        %p374 = pneg %p373
      $region54: #{decoder_forward.1} parent=5 // pred_check_branch
        %376 = sbr.rel (%p374) target = $region56
      $region55: #{decoder_forward.1} parent=5 // pred_region
        %s377 = ssub.s32 %s12, 2
      $region56: #{decoder_forward.1} parent=5 // pred_fallthru
        _
    $region6: #{decoder_forward.1} parent=1 // loop_footer
      %s16 = sadd.s32 1, %s12
    $region7: #{decoder_forward.1} parent=1 // loop_footer_branch
      %11 = sbr.rel target = $region3
    $region8: #{decoder_forward.1} parent=1 // loop_exit
      _
    %378 = vsyncpa [#allocation4], 1
    %s379 = scalar_lea.sflag [#allocation4], 1
    %380 = vsyncpa %s379, 1

</llo_original>
